<compile_context>
chip_gen: v5e
topology: v5e:2x2
jax: 0.10.0
libtpu: 0.0.40
codegen_flags: <defaults>
</compile_context>

<pallas_src>
import jax
import jax.numpy as jnp
from jax.experimental import pallas as pl
from jax.experimental.pallas import tpu as pltpu


# ---------------------------------------------------------------------------
# DDPM schedules (plain JAX glue — tiny 1-D precompute, not the hot path)
# ---------------------------------------------------------------------------
def ddpm_schedules(beta1, beta2, T):
    assert beta1 < beta2 < 1.0, "beta1 and beta2 must be in (0, 1)"
    t = jnp.arange(0, T + 1, dtype=jnp.float32)
    beta_t = (beta2 - beta1) * t / T + beta1
    sqrt_beta_t = jnp.sqrt(beta_t)
    alpha_t = 1.0 - beta_t
    log_alpha_t = jnp.log(alpha_t)
    alpha_bar_t = jnp.exp(jnp.cumsum(log_alpha_t))
    sqrt_ab = jnp.sqrt(alpha_bar_t)
    sqrt_mab = jnp.sqrt(1.0 - alpha_bar_t)
    return {
        "alpha_t": alpha_t,
        "one_over_sqrta": 1.0 / jnp.sqrt(alpha_t),
        "sqrt_beta_t": sqrt_beta_t,
        "alpha_bar_t": alpha_bar_t,
        "sqrt_ab": sqrt_ab,
        "sqrt_mab": sqrt_mab,
        "mab_over_sqrt_mab": (1.0 - alpha_t) / sqrt_mab,
    }


# ---------------------------------------------------------------------------
# Fused Pallas kernel (single invocation, whole batch):
#   x_t  = sqrt_ab[t_b] * x + sqrt_mab[t_b] * noise        (VPU, (B,C,HW))
#   eps  = 1x1-conv_W(x_t) + cond_b                         (C*C VPU FMAs)
#   out  = per-lane partial sums of (noise - eps)^2         ((1, HW))
# ---------------------------------------------------------------------------
def _ddpm_loss_kernel(w_ref,                 # SMEM (C*C,) f32: 1x1-conv weights
                      sa_ref, sm_ref,        # VMEM (B,1,1) f32: per-batch scales
                      cond_ref,              # VMEM (B,C,1) f32: per-batch cond
                      x_ref, noise_ref,      # VMEM (B,C,HW) f32
                      out_ref):              # VMEM (1,HW)  f32: per-lane SSQ
    B, C, HW = x_ref.shape

    x = x_ref[...]
    nz = noise_ref[...]
    cond = cond_ref[...]                     # (B, C, 1)

    # forward diffusion step (per-batch scalar broadcast over (C, HW) tiles)
    x_t = sa_ref[...] * x + sm_ref[...] * nz                 # (B, C, HW)

    # synthetic nn_model: 1x1 conv over channels + per-batch conditioning.
    # C is tiny, so unroll into scalar-broadcast FMAs on lane-dense (B, HW)
    # slabs (avoids a degenerate K=N=4 MXU matmul).
    partial = jnp.zeros((B, HW), jnp.float32)
    for co in range(C):
        eps_co = cond[:, co, :] + w_ref[co] * x_t[:, 0, :]    # (B,1)+(B,HW)
        for ci in range(1, C):
            eps_co = eps_co + w_ref[ci * C + co] * x_t[:, ci, :]
        d = nz[:, co, :] - eps_co
        partial = partial + d * d

    # sublane reduce over B only; final lane reduce happens in the wrapper.
    out_ref[...] = jnp.sum(partial, axis=0, keepdims=True)    # (1, HW)


# ---------------------------------------------------------------------------
# Shared input preparation (RNG draws + conditioning); used by both the
# Pallas path and the test-only reference so the random draws match exactly.
# ---------------------------------------------------------------------------
def _prepare_inputs(x_nchw, c, params, schedules, key, n_T, drop_prob):
    B, C, H, W = x_nchw.shape
    HW = H * W

    k_t, k_noise, k_mask = jax.random.split(key, 3)
    _ts = jax.random.randint(k_t, (B,), 1, n_T + 1)                    # [1, n_T]
    noise_nchw = jax.random.normal(k_noise, x_nchw.shape, jnp.float32)
    context_mask = jax.random.bernoulli(k_mask, drop_prob, (B,)).astype(jnp.float32)

    sa = schedules["sqrt_ab"][_ts].astype(jnp.float32)                 # (B,)
    sm = schedules["sqrt_mab"][_ts].astype(jnp.float32)                # (B,)

    # per-batch conditioning vector of the synthetic nn_model
    t_frac = _ts.astype(jnp.float32) / n_T
    cond = (params["bias"][None, :]
            + t_frac[:, None] * params["w_t"][None, :]
            + (1.0 - context_mask)[:, None] * params["emb"][c])        # (B, C)

    # NCHW already has channels second -> flattening H*W keeps HW on lanes.
    x_flat = x_nchw.reshape(B, C, HW)
    noise_flat = noise_nchw.reshape(B, C, HW)
    return sa, sm, cond, x_flat, noise_flat


def ddpm_forward_loss(x_nchw, c, params, schedules, key, n_T, drop_prob=0.1):
    """Mirrors DDPM.forward: returns scalar MSE loss (Pallas path only)."""
    B, C, H, W = x_nchw.shape
    HW = H * W

    sa, sm, cond, x_flat, noise_flat = _prepare_inputs(
        x_nchw, c, params, schedules, key, n_T, drop_prob)

    out = pl.pallas_call(
        _ddpm_loss_kernel,
        out_shape=jax.ShapeDtypeStruct((1, HW), jnp.float32),
        grid_spec=pltpu.PrefetchScalarGridSpec(
            num_scalar_prefetch=0,
            grid=(1,),                                              # single step
            in_specs=[
                pl.BlockSpec(memory_space=pltpu.MemorySpace.SMEM),  # W (flat)
                pl.BlockSpec((B, 1, 1), lambda i: (0, 0, 0)),       # sa
                pl.BlockSpec((B, 1, 1), lambda i: (0, 0, 0)),       # sm
                pl.BlockSpec((B, C, 1), lambda i: (0, 0, 0)),       # cond
                pl.BlockSpec((B, C, HW), lambda i: (0, 0, 0)),      # x
                pl.BlockSpec((B, C, HW), lambda i: (0, 0, 0)),      # noise
            ],
            out_specs=pl.BlockSpec((1, HW), lambda i: (0, 0)),
        ),
        compiler_params=pltpu.CompilerParams(
            dimension_semantics=("arbitrary",)),
    )(params["w"].reshape(-1),
      sa.reshape(B, 1, 1), sm.reshape(B, 1, 1),
      cond.reshape(B, C, 1),
      x_flat, noise_flat)

    return jnp.sum(out) / (B * C * H * W)


def ddpm_forward_loss_reference(x_nchw, c, params, schedules, key, n_T,
                                drop_prob=0.1):
    """Test-only pure-JAX reference (same RNG draws as the Pallas path)."""
    B, C, H, W = x_nchw.shape
    sa, sm, cond, x_flat, noise_flat = _prepare_inputs(
        x_nchw, c, params, schedules, key, n_T, drop_prob)
    x_t = sa[:, None, None] * x_flat + sm[:, None, None] * noise_flat
    eps = jnp.einsum("cd,bch->bdh", params["w"], x_t) + cond[:, :, None]
    return jnp.mean((noise_flat - eps) ** 2)


if __name__ == "__main__":
    B, C, H, W = 2, 4, 16, 16
    n_T = 400
    betas = (1e-4, 0.02)

    root = jax.random.PRNGKey(0)
    k_x, k_c, k_w, k_b, k_wt, k_e, k_fwd = jax.random.split(root, 7)

    x = jax.random.normal(k_x, (B, C, H, W), jnp.float32)
    c = jax.random.randint(k_c, (B,), 0, 10)

    params = {
        "w": 0.1 * jax.random.normal(k_w, (C, C), jnp.float32),
        "bias": 0.01 * jax.random.normal(k_b, (C,), jnp.float32),
        "w_t": 0.1 * jax.random.normal(k_wt, (C,), jnp.float32),
        "emb": 0.1 * jax.random.normal(k_e, (10, C), jnp.float32),
    }

    schedules = ddpm_schedules(betas[0], betas[1], n_T)

    loss = jax.block_until_ready(
        ddpm_forward_loss(x, c, params, schedules, k_fwd, n_T, drop_prob=0.1))

    # correctness check only (not part of the benchmarked path)
    loss_ref = jax.block_until_ready(
        ddpm_forward_loss_reference(x, c, params, schedules, k_fwd, n_T,
                                    drop_prob=0.1))

    assert jnp.isfinite(loss), "loss is not finite"
    assert jnp.allclose(loss, loss_ref, rtol=1e-5, atol=1e-5), (loss, loss_ref)
    print("KERNEL_OK")
</pallas_src>

<mosaic_0001>
module attributes {stable_mosaic.version = 11 : i64} {
  func.func @_ddpm_loss_kernel(%arg0: i32, %arg1: memref<16xf32, #tpu.memory_space<smem>>, %arg2: memref<2x1x1xf32, #tpu.memory_space<vmem>>, %arg3: memref<2x1x1xf32, #tpu.memory_space<vmem>>, %arg4: memref<2x4x1xf32, #tpu.memory_space<vmem>>, %arg5: memref<2x4x256xf32, #tpu.memory_space<vmem>>, %arg6: memref<2x4x256xf32, #tpu.memory_space<vmem>>, %arg7: memref<1x256xf32, #tpu.memory_space<vmem>>) attributes {dimension_semantics = [#tpu.dimension_semantics<arbitrary>], iteration_bounds = array<i64: 1>, scalar_prefetch = 0 : i64, scratch_operands = 0 : i64, tpu.core_type = #tpu.core_type<tc>, window_params = [{transform_indices = @transform_0, window_bounds = array<i64: 16>}, {pipeline_mode = #tpu.pipeline_mode<synchronous>, transform_indices = @transform_1, window_bounds = array<i64: 2, 1, 1>}, {pipeline_mode = #tpu.pipeline_mode<synchronous>, transform_indices = @transform_2, window_bounds = array<i64: 2, 1, 1>}, {pipeline_mode = #tpu.pipeline_mode<synchronous>, transform_indices = @transform_3, window_bounds = array<i64: 2, 4, 1>}, {pipeline_mode = #tpu.pipeline_mode<synchronous>, transform_indices = @transform_4, window_bounds = array<i64: 2, 4, 256>}, {pipeline_mode = #tpu.pipeline_mode<synchronous>, transform_indices = @transform_5, window_bounds = array<i64: 2, 4, 256>}, {pipeline_mode = #tpu.pipeline_mode<synchronous>, transform_indices = @transform_6, window_bounds = array<i64: 1, 256>}]} {
    %c0 = arith.constant 0 : index
    %c0_0 = arith.constant 0 : index
    %c0_1 = arith.constant 0 : index
    %0 = vector.load %arg5[%c0, %c0_0, %c0_1] : memref<2x4x256xf32, #tpu.memory_space<vmem>>, vector<2x4x256xf32>
    %c0_2 = arith.constant 0 : index
    %c0_3 = arith.constant 0 : index
    %c0_4 = arith.constant 0 : index
    %1 = vector.load %arg6[%c0_2, %c0_3, %c0_4] : memref<2x4x256xf32, #tpu.memory_space<vmem>>, vector<2x4x256xf32>
    %c0_5 = arith.constant 0 : index
    %c0_6 = arith.constant 0 : index
    %c0_7 = arith.constant 0 : index
    %2 = vector.load %arg4[%c0_5, %c0_6, %c0_7] : memref<2x4x1xf32, #tpu.memory_space<vmem>>, vector<2x4x1xf32>
    %c0_8 = arith.constant 0 : index
    %c0_9 = arith.constant 0 : index
    %c0_10 = arith.constant 0 : index
    %3 = vector.load %arg2[%c0_8, %c0_9, %c0_10] : memref<2x1x1xf32, #tpu.memory_space<vmem>>, vector<2x1x1xf32>
    %4 = vector.broadcast %3 : vector<2x1x1xf32> to vector<2x4x256xf32>
    %5 = arith.mulf %4, %0 : vector<2x4x256xf32>
    %c0_11 = arith.constant 0 : index
    %c0_12 = arith.constant 0 : index
    %c0_13 = arith.constant 0 : index
    %6 = vector.load %arg3[%c0_11, %c0_12, %c0_13] : memref<2x1x1xf32, #tpu.memory_space<vmem>>, vector<2x1x1xf32>
    %7 = vector.broadcast %6 : vector<2x1x1xf32> to vector<2x4x256xf32>
    %8 = arith.mulf %7, %1 : vector<2x4x256xf32>
    %9 = arith.addf %5, %8 : vector<2x4x256xf32>
    %cst = arith.constant 0.000000e+00 : f32
    %10 = vector.broadcast %cst : f32 to vector<2x256xf32>
    %11 = vector.extract_strided_slice %2 {offsets = [0, 0, 0], sizes = [2, 1, 1], strides = [1, 1, 1]} : vector<2x4x1xf32> to vector<2x1x1xf32>
    %12 = vector.shape_cast %11 : vector<2x1x1xf32> to vector<2x1xf32>
    %c0_14 = arith.constant 0 : index
    %13 = memref.load %arg1[%c0_14] : memref<16xf32, #tpu.memory_space<smem>>
    %14 = vector.extract_strided_slice %9 {offsets = [0, 0, 0], sizes = [2, 1, 256], strides = [1, 1, 1]} : vector<2x4x256xf32> to vector<2x1x256xf32>
    %15 = vector.shape_cast %14 : vector<2x1x256xf32> to vector<2x256xf32>
    %16 = vector.broadcast %13 : f32 to vector<2x256xf32>
    %17 = arith.mulf %16, %15 : vector<2x256xf32>
    %18 = vector.broadcast %12 : vector<2x1xf32> to vector<2x256xf32>
    %19 = arith.addf %18, %17 : vector<2x256xf32>
    %c4 = arith.constant 4 : index
    %20 = memref.load %arg1[%c4] : memref<16xf32, #tpu.memory_space<smem>>
    %21 = vector.extract_strided_slice %9 {offsets = [0, 1, 0], sizes = [2, 1, 256], strides = [1, 1, 1]} : vector<2x4x256xf32> to vector<2x1x256xf32>
    %22 = vector.shape_cast %21 : vector<2x1x256xf32> to vector<2x256xf32>
    %23 = vector.broadcast %20 : f32 to vector<2x256xf32>
    %24 = arith.mulf %23, %22 : vector<2x256xf32>
    %25 = arith.addf %19, %24 : vector<2x256xf32>
    %c8 = arith.constant 8 : index
    %26 = memref.load %arg1[%c8] : memref<16xf32, #tpu.memory_space<smem>>
    %27 = vector.extract_strided_slice %9 {offsets = [0, 2, 0], sizes = [2, 1, 256], strides = [1, 1, 1]} : vector<2x4x256xf32> to vector<2x1x256xf32>
    %28 = vector.shape_cast %27 : vector<2x1x256xf32> to vector<2x256xf32>
    %29 = vector.broadcast %26 : f32 to vector<2x256xf32>
    %30 = arith.mulf %29, %28 : vector<2x256xf32>
    %31 = arith.addf %25, %30 : vector<2x256xf32>
    %c12 = arith.constant 12 : index
    %32 = memref.load %arg1[%c12] : memref<16xf32, #tpu.memory_space<smem>>
    %33 = vector.extract_strided_slice %9 {offsets = [0, 3, 0], sizes = [2, 1, 256], strides = [1, 1, 1]} : vector<2x4x256xf32> to vector<2x1x256xf32>
    %34 = vector.shape_cast %33 : vector<2x1x256xf32> to vector<2x256xf32>
    %35 = vector.broadcast %32 : f32 to vector<2x256xf32>
    %36 = arith.mulf %35, %34 : vector<2x256xf32>
    %37 = arith.addf %31, %36 : vector<2x256xf32>
    %38 = vector.extract_strided_slice %1 {offsets = [0, 0, 0], sizes = [2, 1, 256], strides = [1, 1, 1]} : vector<2x4x256xf32> to vector<2x1x256xf32>
    %39 = vector.shape_cast %38 : vector<2x1x256xf32> to vector<2x256xf32>
    %40 = arith.subf %39, %37 : vector<2x256xf32>
    %41 = arith.mulf %40, %40 : vector<2x256xf32>
    %42 = arith.addf %10, %41 : vector<2x256xf32>
    %43 = vector.extract_strided_slice %2 {offsets = [0, 1, 0], sizes = [2, 1, 1], strides = [1, 1, 1]} : vector<2x4x1xf32> to vector<2x1x1xf32>
    %44 = vector.shape_cast %43 : vector<2x1x1xf32> to vector<2x1xf32>
    %c1 = arith.constant 1 : index
    %45 = memref.load %arg1[%c1] : memref<16xf32, #tpu.memory_space<smem>>
    %46 = vector.extract_strided_slice %9 {offsets = [0, 0, 0], sizes = [2, 1, 256], strides = [1, 1, 1]} : vector<2x4x256xf32> to vector<2x1x256xf32>
    %47 = vector.shape_cast %46 : vector<2x1x256xf32> to vector<2x256xf32>
    %48 = vector.broadcast %45 : f32 to vector<2x256xf32>
    %49 = arith.mulf %48, %47 : vector<2x256xf32>
    %50 = vector.broadcast %44 : vector<2x1xf32> to vector<2x256xf32>
    %51 = arith.addf %50, %49 : vector<2x256xf32>
    %c5 = arith.constant 5 : index
    %52 = memref.load %arg1[%c5] : memref<16xf32, #tpu.memory_space<smem>>
    %53 = vector.extract_strided_slice %9 {offsets = [0, 1, 0], sizes = [2, 1, 256], strides = [1, 1, 1]} : vector<2x4x256xf32> to vector<2x1x256xf32>
    %54 = vector.shape_cast %53 : vector<2x1x256xf32> to vector<2x256xf32>
    %55 = vector.broadcast %52 : f32 to vector<2x256xf32>
    %56 = arith.mulf %55, %54 : vector<2x256xf32>
    %57 = arith.addf %51, %56 : vector<2x256xf32>
    %c9 = arith.constant 9 : index
    %58 = memref.load %arg1[%c9] : memref<16xf32, #tpu.memory_space<smem>>
    %59 = vector.extract_strided_slice %9 {offsets = [0, 2, 0], sizes = [2, 1, 256], strides = [1, 1, 1]} : vector<2x4x256xf32> to vector<2x1x256xf32>
    %60 = vector.shape_cast %59 : vector<2x1x256xf32> to vector<2x256xf32>
    %61 = vector.broadcast %58 : f32 to vector<2x256xf32>
    %62 = arith.mulf %61, %60 : vector<2x256xf32>
    %63 = arith.addf %57, %62 : vector<2x256xf32>
    %c13 = arith.constant 13 : index
    %64 = memref.load %arg1[%c13] : memref<16xf32, #tpu.memory_space<smem>>
    %65 = vector.extract_strided_slice %9 {offsets = [0, 3, 0], sizes = [2, 1, 256], strides = [1, 1, 1]} : vector<2x4x256xf32> to vector<2x1x256xf32>
    %66 = vector.shape_cast %65 : vector<2x1x256xf32> to vector<2x256xf32>
    %67 = vector.broadcast %64 : f32 to vector<2x256xf32>
    %68 = arith.mulf %67, %66 : vector<2x256xf32>
    %69 = arith.addf %63, %68 : vector<2x256xf32>
    %70 = vector.extract_strided_slice %1 {offsets = [0, 1, 0], sizes = [2, 1, 256], strides = [1, 1, 1]} : vector<2x4x256xf32> to vector<2x1x256xf32>
    %71 = vector.shape_cast %70 : vector<2x1x256xf32> to vector<2x256xf32>
    %72 = arith.subf %71, %69 : vector<2x256xf32>
    %73 = arith.mulf %72, %72 : vector<2x256xf32>
    %74 = arith.addf %42, %73 : vector<2x256xf32>
    %75 = vector.extract_strided_slice %2 {offsets = [0, 2, 0], sizes = [2, 1, 1], strides = [1, 1, 1]} : vector<2x4x1xf32> to vector<2x1x1xf32>
    %76 = vector.shape_cast %75 : vector<2x1x1xf32> to vector<2x1xf32>
    %c2 = arith.constant 2 : index
    %77 = memref.load %arg1[%c2] : memref<16xf32, #tpu.memory_space<smem>>
    %78 = vector.extract_strided_slice %9 {offsets = [0, 0, 0], sizes = [2, 1, 256], strides = [1, 1, 1]} : vector<2x4x256xf32> to vector<2x1x256xf32>
    %79 = vector.shape_cast %78 : vector<2x1x256xf32> to vector<2x256xf32>
    %80 = vector.broadcast %77 : f32 to vector<2x256xf32>
    %81 = arith.mulf %80, %79 : vector<2x256xf32>
    %82 = vector.broadcast %76 : vector<2x1xf32> to vector<2x256xf32>
    %83 = arith.addf %82, %81 : vector<2x256xf32>
    %c6 = arith.constant 6 : index
    %84 = memref.load %arg1[%c6] : memref<16xf32, #tpu.memory_space<smem>>
    %85 = vector.extract_strided_slice %9 {offsets = [0, 1, 0], sizes = [2, 1, 256], strides = [1, 1, 1]} : vector<2x4x256xf32> to vector<2x1x256xf32>
    %86 = vector.shape_cast %85 : vector<2x1x256xf32> to vector<2x256xf32>
    %87 = vector.broadcast %84 : f32 to vector<2x256xf32>
    %88 = arith.mulf %87, %86 : vector<2x256xf32>
    %89 = arith.addf %83, %88 : vector<2x256xf32>
    %c10 = arith.constant 10 : index
    %90 = memref.load %arg1[%c10] : memref<16xf32, #tpu.memory_space<smem>>
    %91 = vector.extract_strided_slice %9 {offsets = [0, 2, 0], sizes = [2, 1, 256], strides = [1, 1, 1]} : vector<2x4x256xf32> to vector<2x1x256xf32>
    %92 = vector.shape_cast %91 : vector<2x1x256xf32> to vector<2x256xf32>
    %93 = vector.broadcast %90 : f32 to vector<2x256xf32>
    %94 = arith.mulf %93, %92 : vector<2x256xf32>
    %95 = arith.addf %89, %94 : vector<2x256xf32>
    %c14 = arith.constant 14 : index
    %96 = memref.load %arg1[%c14] : memref<16xf32, #tpu.memory_space<smem>>
    %97 = vector.extract_strided_slice %9 {offsets = [0, 3, 0], sizes = [2, 1, 256], strides = [1, 1, 1]} : vector<2x4x256xf32> to vector<2x1x256xf32>
    %98 = vector.shape_cast %97 : vector<2x1x256xf32> to vector<2x256xf32>
    %99 = vector.broadcast %96 : f32 to vector<2x256xf32>
    %100 = arith.mulf %99, %98 : vector<2x256xf32>
    %101 = arith.addf %95, %100 : vector<2x256xf32>
    %102 = vector.extract_strided_slice %1 {offsets = [0, 2, 0], sizes = [2, 1, 256], strides = [1, 1, 1]} : vector<2x4x256xf32> to vector<2x1x256xf32>
    %103 = vector.shape_cast %102 : vector<2x1x256xf32> to vector<2x256xf32>
    %104 = arith.subf %103, %101 : vector<2x256xf32>
    %105 = arith.mulf %104, %104 : vector<2x256xf32>
    %106 = arith.addf %74, %105 : vector<2x256xf32>
    %107 = vector.extract_strided_slice %2 {offsets = [0, 3, 0], sizes = [2, 1, 1], strides = [1, 1, 1]} : vector<2x4x1xf32> to vector<2x1x1xf32>
    %108 = vector.shape_cast %107 : vector<2x1x1xf32> to vector<2x1xf32>
    %c3 = arith.constant 3 : index
    %109 = memref.load %arg1[%c3] : memref<16xf32, #tpu.memory_space<smem>>
    %110 = vector.extract_strided_slice %9 {offsets = [0, 0, 0], sizes = [2, 1, 256], strides = [1, 1, 1]} : vector<2x4x256xf32> to vector<2x1x256xf32>
    %111 = vector.shape_cast %110 : vector<2x1x256xf32> to vector<2x256xf32>
    %112 = vector.broadcast %109 : f32 to vector<2x256xf32>
    %113 = arith.mulf %112, %111 : vector<2x256xf32>
    %114 = vector.broadcast %108 : vector<2x1xf32> to vector<2x256xf32>
    %115 = arith.addf %114, %113 : vector<2x256xf32>
    %c7 = arith.constant 7 : index
    %116 = memref.load %arg1[%c7] : memref<16xf32, #tpu.memory_space<smem>>
    %117 = vector.extract_strided_slice %9 {offsets = [0, 1, 0], sizes = [2, 1, 256], strides = [1, 1, 1]} : vector<2x4x256xf32> to vector<2x1x256xf32>
    %118 = vector.shape_cast %117 : vector<2x1x256xf32> to vector<2x256xf32>
    %119 = vector.broadcast %116 : f32 to vector<2x256xf32>
    %120 = arith.mulf %119, %118 : vector<2x256xf32>
    %121 = arith.addf %115, %120 : vector<2x256xf32>
    %c11 = arith.constant 11 : index
    %122 = memref.load %arg1[%c11] : memref<16xf32, #tpu.memory_space<smem>>
    %123 = vector.extract_strided_slice %9 {offsets = [0, 2, 0], sizes = [2, 1, 256], strides = [1, 1, 1]} : vector<2x4x256xf32> to vector<2x1x256xf32>
    %124 = vector.shape_cast %123 : vector<2x1x256xf32> to vector<2x256xf32>
    %125 = vector.broadcast %122 : f32 to vector<2x256xf32>
    %126 = arith.mulf %125, %124 : vector<2x256xf32>
    %127 = arith.addf %121, %126 : vector<2x256xf32>
    %c15 = arith.constant 15 : index
    %128 = memref.load %arg1[%c15] : memref<16xf32, #tpu.memory_space<smem>>
    %129 = vector.extract_strided_slice %9 {offsets = [0, 3, 0], sizes = [2, 1, 256], strides = [1, 1, 1]} : vector<2x4x256xf32> to vector<2x1x256xf32>
    %130 = vector.shape_cast %129 : vector<2x1x256xf32> to vector<2x256xf32>
    %131 = vector.broadcast %128 : f32 to vector<2x256xf32>
    %132 = arith.mulf %131, %130 : vector<2x256xf32>
    %133 = arith.addf %127, %132 : vector<2x256xf32>
    %134 = vector.extract_strided_slice %1 {offsets = [0, 3, 0], sizes = [2, 1, 256], strides = [1, 1, 1]} : vector<2x4x256xf32> to vector<2x1x256xf32>
    %135 = vector.shape_cast %134 : vector<2x1x256xf32> to vector<2x256xf32>
    %136 = arith.subf %135, %133 : vector<2x256xf32>
    %137 = arith.mulf %136, %136 : vector<2x256xf32>
    %138 = arith.addf %106, %137 : vector<2x256xf32>
    %cst_15 = arith.constant dense<0.000000e+00> : vector<256xf32>
    %139 = vector.multi_reduction <add>, %138, %cst_15 [0] : vector<2x256xf32> to vector<256xf32>
    %140 = vector.shape_cast %139 : vector<256xf32> to vector<1x256xf32>
    %c0_16 = arith.constant 0 : index
    %c0_17 = arith.constant 0 : index
    %141 = vector.load %arg7[%c0_16, %c0_17] : memref<1x256xf32, #tpu.memory_space<vmem>>, vector<1x256xf32>
    tpu.vector_store %arg7[%c0_16, %c0_17], %140 {strides = array<i32>} : memref<1x256xf32, #tpu.memory_space<vmem>>, vector<1x256xf32>,
    return
  }
  func.func @transform_0(%arg0: i32) -> i32 {
    %c0_i32 = arith.constant 0 : i32
    %c0_i32_0 = arith.constant 0 : i32
    return %c0_i32 : i32
  }
  func.func @transform_1(%arg0: i32) -> (i32, i32, i32) {
    %c0_i32 = arith.constant 0 : i32
    %c0_i32_0 = arith.constant 0 : i32
    %c0_i32_1 = arith.constant 0 : i32
    %c0_i32_2 = arith.constant 0 : i32
    return %c0_i32, %c0_i32_0, %c0_i32_1 : i32, i32, i32
  }
  func.func @transform_2(%arg0: i32) -> (i32, i32, i32) {
    %c0_i32 = arith.constant 0 : i32
    %c0_i32_0 = arith.constant 0 : i32
    %c0_i32_1 = arith.constant 0 : i32
    %c0_i32_2 = arith.constant 0 : i32
    return %c0_i32, %c0_i32_0, %c0_i32_1 : i32, i32, i32
  }
  func.func @transform_3(%arg0: i32) -> (i32, i32, i32) {
    %c0_i32 = arith.constant 0 : i32
    %c0_i32_0 = arith.constant 0 : i32
    %c0_i32_1 = arith.constant 0 : i32
    %c0_i32_2 = arith.constant 0 : i32
    return %c0_i32, %c0_i32_0, %c0_i32_1 : i32, i32, i32
  }
  func.func @transform_4(%arg0: i32) -> (i32, i32, i32) {
    %c0_i32 = arith.constant 0 : i32
    %c0_i32_0 = arith.constant 0 : i32
    %c0_i32_1 = arith.constant 0 : i32
    %c0_i32_2 = arith.constant 0 : i32
    return %c0_i32, %c0_i32_0, %c0_i32_1 : i32, i32, i32
  }
  func.func @transform_5(%arg0: i32) -> (i32, i32, i32) {
    %c0_i32 = arith.constant 0 : i32
    %c0_i32_0 = arith.constant 0 : i32
    %c0_i32_1 = arith.constant 0 : i32
    %c0_i32_2 = arith.constant 0 : i32
    return %c0_i32, %c0_i32_0, %c0_i32_1 : i32, i32, i32
  }
  func.func @transform_6(%arg0: i32) -> (i32, i32) {
    %c0_i32 = arith.constant 0 : i32
    %c0_i32_0 = arith.constant 0 : i32
    %c0_i32_1 = arith.constant 0 : i32
    return %c0_i32, %c0_i32_0 : i32, i32
  }
}

</mosaic_0001>

<llo_original>
// kernel: tpu_custom_call.1
$region0: #{tpu_custom_call.1}
  #allocation0 [shape = 'u32[]', space=smem, size = 0x4, offset = 0x4, fixed_abs, tag = 'smem constant byte address 0x4 - core index']
  #allocation1 [shape = 'u32[72,128]{1,0:T(1,128)}', space=vmem, size = 0x9000, scoped, tag = 'internal scratch']
  %s0 = inlined_call_operand.vmem [shape: f32[16], index: 0, kind: input, shape index: {}]
  %s1 = inlined_call_operand.vmem [shape: f32[2,1,1], index: 1, kind: input, shape index: {}]
  %s2 = inlined_call_operand.vmem [shape: f32[2,1,1], index: 2, kind: input, shape index: {}]
  %s3 = inlined_call_operand.vmem [shape: f32[2,4,1], index: 3, kind: input, shape index: {}]
  %s4 = inlined_call_operand.hbm [shape: f32[2,4,256], index: 4, kind: input, shape index: {}]
  %s5 = inlined_call_operand.hbm [shape: f32[2,4,256], index: 5, kind: input, shape index: {}]
  %s6 = inlined_call_operand.hbm [shape: f32[1,256], index: 6, kind: output, shape index: {}]
  %s7 = sld [smem:[#allocation0]]
  $region46: #{tpu_custom_call.1} parent=0
    _
  %s9 = ssub.s32 1, %s7
  %s10 = scalar_select 0, %s9, %s7
  $region1: #{tpu_custom_call.1} parent=0
    #allocation2 [shape = 'u8[512]{0}', space=smem, size = 0x200, scoped, tag = 'input window, operand 0, single buffered']
    #allocation3 [shape = 's32[1]{0}', space=sflag, size = 0x4, scoped, tag = 'scoped memory for tpu_custom_call.1']
    #allocation4 [shape = 's32[1]{0}', space=sflag, size = 0x4, scoped, tag = 'scoped memory for tpu_custom_call.1']
    #allocation5 [shape = 's32[1]{0}', space=sflag, size = 0x4, scoped, tag = 'scoped memory for tpu_custom_call.1']
    #allocation6 [shape = 'u8[8192]{0}', space=vmem, size = 0x2000, scoped, tag = 'input window, operand 4, single buffered']
    #allocation7 [shape = 'u8[8192]{0}', space=vmem, size = 0x2000, scoped, tag = 'input window, operand 5, single buffered']
    #allocation8 [shape = 's32[1]{0}', space=sflag, size = 0x4, scoped, tag = 'scoped memory for tpu_custom_call.1']
    #allocation9 [shape = 'u8[1024]{0}', space=vmem, size = 0x400, scoped, tag = 'output window, operand 0, single buffered']
    %11 = vsyncpa [#allocation5], 0
    %12 = vsyncpa [#allocation3], 0
    %13 = vsyncpa [#allocation8], 0
    %14 = vsyncpa [#allocation4], 0
    // Predicated region
    $region2: #{tpu_custom_call.1} parent=1 // pred_check
      _
    $region3: #{tpu_custom_call.1} parent=1 // pred_check_branch
      %16 = sbr.rel (0) target = $region5
    $region4: #{tpu_custom_call.1} parent=1 // pred_region
      %18 = vsyncadd [#allocation5], 0
      %s20 = sshll.u32 %s0, 4
      %s21 = int_to_ptr.vmem [resolvable:$true] %s20
      %23 = dma.vmem_to_smem %s21, 16, [#allocation2], [#allocation5]
    $region5: #{tpu_custom_call.1} parent=1 // pred_fallthru
      _
    // Predicated region
    $region6: #{tpu_custom_call.1} parent=1 // pred_check
      _
    $region7: #{tpu_custom_call.1} parent=1 // pred_check_branch
      %25 = sbr.rel (0) target = $region9
    $region8: #{tpu_custom_call.1} parent=1 // pred_region
      _
    $region9: #{tpu_custom_call.1} parent=1 // pred_fallthru
      _
    // Predicated region
    $region10: #{tpu_custom_call.1} parent=1 // pred_check
      _
    $region11: #{tpu_custom_call.1} parent=1 // pred_check_branch
      %27 = sbr.rel (0) target = $region13
    $region12: #{tpu_custom_call.1} parent=1 // pred_region
      _
    $region13: #{tpu_custom_call.1} parent=1 // pred_fallthru
      _
    // Predicated region
    $region14: #{tpu_custom_call.1} parent=1 // pred_check
      _
    $region15: #{tpu_custom_call.1} parent=1 // pred_check_branch
      %29 = sbr.rel (0) target = $region17
    $region16: #{tpu_custom_call.1} parent=1 // pred_region
      _
    $region17: #{tpu_custom_call.1} parent=1 // pred_fallthru
      _
    // Predicated region
    $region18: #{tpu_custom_call.1} parent=1 // pred_check
      _
    $region19: #{tpu_custom_call.1} parent=1 // pred_check_branch
      %31 = sbr.rel (0) target = $region21
    $region20: #{tpu_custom_call.1} parent=1 // pred_region
      %33 = vsyncadd [#allocation3], 0
      %s34 = sshll.u32 %s4, 4
      %s35 = int_to_ptr.hbm [resolvable:$true] %s34
      %s36 = sshll.u32 [#allocation6], 4
      %s37 = int_to_ptr.vmem [resolvable:$true] %s36
      %42 = dma.hbm_to_vmem [thread:$0]  %s35, 256, %s37, [#allocation3], 128, 128, 8
    $region21: #{tpu_custom_call.1} parent=1 // pred_fallthru
      _
    // Predicated region
    $region22: #{tpu_custom_call.1} parent=1 // pred_check
      _
    $region23: #{tpu_custom_call.1} parent=1 // pred_check_branch
      %44 = sbr.rel (0) target = $region25
    $region24: #{tpu_custom_call.1} parent=1 // pred_region
      %46 = vsyncadd [#allocation8], 0
      %s47 = sshll.u32 %s5, 4
      %s48 = int_to_ptr.hbm [resolvable:$true] %s47
      %s49 = sshll.u32 [#allocation7], 4
      %s50 = int_to_ptr.vmem [resolvable:$true] %s49
      %55 = dma.hbm_to_vmem [thread:$0]  %s48, 256, %s50, [#allocation8], 128, 128, 8
    $region25: #{tpu_custom_call.1} parent=1 // pred_fallthru
      _
    // Predicated region
    $region26: #{tpu_custom_call.1} parent=1 // pred_check
      _
    $region27: #{tpu_custom_call.1} parent=1 // pred_check_branch
      %57 = sbr.rel (0) target = $region29
    $region28: #{tpu_custom_call.1} parent=1 // pred_region
      %59 = dma.done [#allocation5], 16
    $region29: #{tpu_custom_call.1} parent=1 // pred_fallthru
      _
    // Predicated region
    $region30: #{tpu_custom_call.1} parent=1 // pred_check
      _
    $region31: #{tpu_custom_call.1} parent=1 // pred_check_branch
      %61 = sbr.rel (0) target = $region33
    $region32: #{tpu_custom_call.1} parent=1 // pred_region
      %63 = dma.done [#allocation3], 256
    $region33: #{tpu_custom_call.1} parent=1 // pred_fallthru
      _
    // Predicated region
    $region34: #{tpu_custom_call.1} parent=1 // pred_check
      _
    $region35: #{tpu_custom_call.1} parent=1 // pred_check_branch
      %65 = sbr.rel (0) target = $region37
    $region36: #{tpu_custom_call.1} parent=1 // pred_region
      %67 = dma.done [#allocation8], 256
    $region37: #{tpu_custom_call.1} parent=1 // pred_fallthru
      _
    %68 = sfence
    %v69 = vld [vmem:[#allocation6] sm:$0xff]
    %v70 = vld [vmem:[#allocation6 + $0x8] sm:$0xff]
    %v71 = vld [vmem:[#allocation7] sm:$0xff]
    %v72 = vld [vmem:[#allocation7 + $0x8] sm:$0xff]
    %v73 = vld [vmem:[%s3] sm:$0xf]
    %v74 = vld [vmem:[%s3 + $0x4] sm:$0xf]
    %v75 = vld [vmem:[%s1] sm:$0x1]
    %v76 = vld [vmem:[%s1 + $0x1] sm:$0x1]
    %v79 = vperm.slane %v75, 0
    %v80 = vperm.slane %v76, 0
    %81 = vset.pattern.permute.xlu0 0
    %82 = vperm.xlu0 %81, %v79
    %v83 = vpop.permute.xlu0 %82
    %85 = vset.pattern.permute.xlu0 0
    %86 = vperm.xlu0 %85, %v80
    %v87 = vpop.permute.xlu0 %86
    %v89 = vmul.f32 %v83, %v69
    %v90 = vmul.f32 %v87, %v70
    %v91 = vld [vmem:[%s2] sm:$0x1]
    %v92 = vld [vmem:[%s2 + $0x1] sm:$0x1]
    %v95 = vperm.slane %v91, 0
    %v96 = vperm.slane %v92, 0
    %97 = vset.pattern.permute.xlu0 0
    %98 = vperm.xlu0 %97, %v95
    %v99 = vpop.permute.xlu0 %98
    %101 = vset.pattern.permute.xlu0 0
    %102 = vperm.xlu0 %101, %v96
    %v103 = vpop.permute.xlu0 %102
    %v105 = vmul.f32 %v99, %v71
    %v106 = vmul.f32 %v103, %v72
    %v107 = vadd.f32 %v89, %v105
    %v108 = vadd.f32 %v90, %v106
    %s109 = sld [smem:[#allocation2]]
    %v110 = vstv %s109
    %v111 = vmul.f32 %v110, %v107
    %v112 = vmul.f32 %v110, %v108
    %114 = vset.pattern.permute.xlu0 0
    %115 = vperm.xlu0 %114, %v73
    %v116 = vpop.permute.xlu0 %115
    %119 = vset.pattern.permute.xlu0 0
    %120 = vperm.xlu0 %119, %v74
    %v121 = vpop.permute.xlu0 %120
    %v125 = vperm.slane %v111, 0
    %v126 = vperm.slane %v111, 4
    %v127 = vperm.slane %v112, 0
    %v128 = vperm.slane %v112, 4
    %v133 = vadd.f32 %v116, %v125
    %v134 = vadd.f32 %v116, %v126
    %v135 = vadd.f32 %v121, %v127
    %v136 = vadd.f32 %v121, %v128
    %s137 = sld [smem:[#allocation2 + $0x4]]
    %v138 = vstv %s137
    %v139 = vmul.f32 %v138, %v107
    %v140 = vmul.f32 %v138, %v108
    %v143 = vperm.slane %v139, 1
    %v144 = vperm.slane %v139, 5
    %v145 = vperm.slane %v140, 1
    %v146 = vperm.slane %v140, 5
    %v151 = vadd.f32 %v133, %v143
    %v152 = vadd.f32 %v134, %v144
    %v153 = vadd.f32 %v135, %v145
    %v154 = vadd.f32 %v136, %v146
    %s155 = sld [smem:[#allocation2 + $0x8]]
    %v156 = vstv %s155
    %v157 = vmul.f32 %v156, %v107
    %v158 = vmul.f32 %v156, %v108
    %v161 = vperm.slane %v157, 2
    %v162 = vperm.slane %v157, 6
    %v163 = vperm.slane %v158, 2
    %v164 = vperm.slane %v158, 6
    %v169 = vadd.f32 %v151, %v161
    %v170 = vadd.f32 %v152, %v162
    %v171 = vadd.f32 %v153, %v163
    %v172 = vadd.f32 %v154, %v164
    %s173 = sld [smem:[#allocation2 + $0xc]]
    %v174 = vstv %s173
    %v175 = vmul.f32 %v174, %v107
    %v176 = vmul.f32 %v174, %v108
    %v179 = vperm.slane %v175, 3
    %v180 = vperm.slane %v175, 7
    %v181 = vperm.slane %v176, 3
    %v182 = vperm.slane %v176, 7
    %v187 = vadd.f32 %v169, %v179
    %v188 = vadd.f32 %v170, %v180
    %v189 = vadd.f32 %v171, %v181
    %v190 = vadd.f32 %v172, %v182
    %v195 = vrot.slane %v188, 4
    %v196 = vrot.slane %v190, 4
    %vm197 = vcmask 1043456
    %v198 = vsel %vm197, %v187, %v195
    %v199 = vsel %vm197, %v189, %v196
    %v202 = vsub.f32 %v71, %v198
    %v203 = vsub.f32 %v72, %v199
    %v204 = vmul.f32 %v202, %v202
    %v205 = vmul.f32 %v203, %v203
    %v206 = vadd.f32 %v204, 0.0
    %v207 = vadd.f32 %v205, 0.0
    %s208 = sld [smem:[#allocation2 + $0x1]]
    %v209 = vstv %s208
    %v210 = vmul.f32 %v209, %v107
    %v211 = vmul.f32 %v209, %v108
    %v214 = vperm.slane %v210, 0
    %v215 = vperm.slane %v210, 4
    %v216 = vperm.slane %v211, 0
    %v217 = vperm.slane %v211, 4
    %v222 = vadd.f32 %v116, %v214
    %v223 = vadd.f32 %v116, %v215
    %v224 = vadd.f32 %v121, %v216
    %v225 = vadd.f32 %v121, %v217
    %s226 = sld [smem:[#allocation2 + $0x5]]
    %v227 = vstv %s226
    %v228 = vmul.f32 %v227, %v107
    %v229 = vmul.f32 %v227, %v108
    %v232 = vperm.slane %v228, 1
    %v233 = vperm.slane %v228, 5
    %v234 = vperm.slane %v229, 1
    %v235 = vperm.slane %v229, 5
    %v240 = vadd.f32 %v222, %v232
    %v241 = vadd.f32 %v223, %v233
    %v242 = vadd.f32 %v224, %v234
    %v243 = vadd.f32 %v225, %v235
    %s244 = sld [smem:[#allocation2 + $0x9]]
    %v245 = vstv %s244
    %v246 = vmul.f32 %v245, %v107
    %v247 = vmul.f32 %v245, %v108
    %v250 = vperm.slane %v246, 2
    %v251 = vperm.slane %v246, 6
    %v252 = vperm.slane %v247, 2
    %v253 = vperm.slane %v247, 6
    %v258 = vadd.f32 %v240, %v250
    %v259 = vadd.f32 %v241, %v251
    %v260 = vadd.f32 %v242, %v252
    %v261 = vadd.f32 %v243, %v253
    %s262 = sld [smem:[#allocation2 + $0xd]]
    %v263 = vstv %s262
    %v264 = vmul.f32 %v263, %v107
    %v265 = vmul.f32 %v263, %v108
    %v268 = vperm.slane %v264, 3
    %v269 = vperm.slane %v264, 7
    %v270 = vperm.slane %v265, 3
    %v271 = vperm.slane %v265, 7
    %v276 = vadd.f32 %v258, %v268
    %v277 = vadd.f32 %v259, %v269
    %v278 = vadd.f32 %v260, %v270
    %v279 = vadd.f32 %v261, %v271
    %v284 = vrot.slane %v277, 4
    %v285 = vrot.slane %v279, 4
    %v286 = vsel %vm197, %v276, %v284
    %v287 = vsel %vm197, %v278, %v285
    %v290 = vsub.f32 %v71, %v286
    %v291 = vsub.f32 %v72, %v287
    %v292 = vmul.f32 %v290, %v290
    %v293 = vmul.f32 %v291, %v291
    %v296 = vrot.slane %v292, 5
    %v297 = vrot.slane %v296, 4
    %v298 = vrot.slane %v293, 5
    %v299 = vrot.slane %v298, 4
    %v302 = vadd.f32 %v206, %v297
    %v303 = vadd.f32 %v207, %v299
    %s304 = sld [smem:[#allocation2 + $0x2]]
    %v305 = vstv %s304
    %v306 = vmul.f32 %v305, %v107
    %v307 = vmul.f32 %v305, %v108
    %v310 = vperm.slane %v306, 0
    %v311 = vperm.slane %v306, 4
    %v312 = vperm.slane %v307, 0
    %v313 = vperm.slane %v307, 4
    %v318 = vadd.f32 %v116, %v310
    %v319 = vadd.f32 %v116, %v311
    %v320 = vadd.f32 %v121, %v312
    %v321 = vadd.f32 %v121, %v313
    %s322 = sld [smem:[#allocation2 + $0x6]]
    %v323 = vstv %s322
    %v324 = vmul.f32 %v323, %v107
    %v325 = vmul.f32 %v323, %v108
    %v328 = vperm.slane %v324, 1
    %v329 = vperm.slane %v324, 5
    %v330 = vperm.slane %v325, 1
    %v331 = vperm.slane %v325, 5
    %v336 = vadd.f32 %v318, %v328
    %v337 = vadd.f32 %v319, %v329
    %v338 = vadd.f32 %v320, %v330
    %v339 = vadd.f32 %v321, %v331
    %s340 = sld [smem:[#allocation2 + $0xa]]
    %v341 = vstv %s340
    %v342 = vmul.f32 %v341, %v107
    %v343 = vmul.f32 %v341, %v108
    %v346 = vperm.slane %v342, 2
    %v347 = vperm.slane %v342, 6
    %v348 = vperm.slane %v343, 2
    %v349 = vperm.slane %v343, 6
    %v354 = vadd.f32 %v336, %v346
    %v355 = vadd.f32 %v337, %v347
    %v356 = vadd.f32 %v338, %v348
    %v357 = vadd.f32 %v339, %v349
    %s358 = sld [smem:[#allocation2 + $0xe]]
    %v359 = vstv %s358
    %v360 = vmul.f32 %v359, %v107
    %v361 = vmul.f32 %v359, %v108
    %v364 = vperm.slane %v360, 3
    %v365 = vperm.slane %v360, 7
    %v366 = vperm.slane %v361, 3
    %v367 = vperm.slane %v361, 7
    %v372 = vadd.f32 %v354, %v364
    %v373 = vadd.f32 %v355, %v365
    %v374 = vadd.f32 %v356, %v366
    %v375 = vadd.f32 %v357, %v367
    %v380 = vrot.slane %v373, 4
    %v381 = vrot.slane %v375, 4
    %v382 = vsel %vm197, %v372, %v380
    %v383 = vsel %vm197, %v374, %v381
    %v386 = vsub.f32 %v71, %v382
    %v387 = vsub.f32 %v72, %v383
    %v388 = vmul.f32 %v386, %v386
    %v389 = vmul.f32 %v387, %v387
    %v392 = vrot.slane %v388, 6
    %v393 = vrot.slane %v392, 4
    %v394 = vrot.slane %v389, 6
    %v395 = vrot.slane %v394, 4
    %v398 = vadd.f32 %v302, %v393
    %v399 = vadd.f32 %v303, %v395
    %s400 = sld [smem:[#allocation2 + $0x3]]
    %v401 = vstv %s400
    %v402 = vmul.f32 %v401, %v107
    %v403 = vmul.f32 %v401, %v108
    %v406 = vperm.slane %v402, 0
    %v407 = vperm.slane %v402, 4
    %v408 = vperm.slane %v403, 0
    %v409 = vperm.slane %v403, 4
    %v414 = vadd.f32 %v116, %v406
    %v415 = vadd.f32 %v116, %v407
    %v416 = vadd.f32 %v121, %v408
    %v417 = vadd.f32 %v121, %v409
    %s418 = sld [smem:[#allocation2 + $0x7]]
    %v419 = vstv %s418
    %v420 = vmul.f32 %v419, %v107
    %v421 = vmul.f32 %v419, %v108
    %v424 = vperm.slane %v420, 1
    %v425 = vperm.slane %v420, 5
    %v426 = vperm.slane %v421, 1
    %v427 = vperm.slane %v421, 5
    %v432 = vadd.f32 %v414, %v424
    %v433 = vadd.f32 %v415, %v425
    %v434 = vadd.f32 %v416, %v426
    %v435 = vadd.f32 %v417, %v427
    %s436 = sld [smem:[#allocation2 + $0xb]]
    %v437 = vstv %s436
    %v438 = vmul.f32 %v437, %v107
    %v439 = vmul.f32 %v437, %v108
    %v442 = vperm.slane %v438, 2
    %v443 = vperm.slane %v438, 6
    %v444 = vperm.slane %v439, 2
    %v445 = vperm.slane %v439, 6
    %v450 = vadd.f32 %v432, %v442
    %v451 = vadd.f32 %v433, %v443
    %v452 = vadd.f32 %v434, %v444
    %v453 = vadd.f32 %v435, %v445
    %s454 = sld [smem:[#allocation2 + $0xf]]
    %v455 = vstv %s454
    %v456 = vmul.f32 %v455, %v107
    %v457 = vmul.f32 %v455, %v108
    %v460 = vperm.slane %v456, 3
    %v461 = vperm.slane %v456, 7
    %v462 = vperm.slane %v457, 3
    %v463 = vperm.slane %v457, 7
    %v468 = vadd.f32 %v450, %v460
    %v469 = vadd.f32 %v451, %v461
    %v470 = vadd.f32 %v452, %v462
    %v471 = vadd.f32 %v453, %v463
    %v476 = vrot.slane %v469, 4
    %v477 = vrot.slane %v471, 4
    %v478 = vsel %vm197, %v468, %v476
    %v479 = vsel %vm197, %v470, %v477
    %v482 = vsub.f32 %v71, %v478
    %v483 = vsub.f32 %v72, %v479
    %v484 = vmul.f32 %v482, %v482
    %v485 = vmul.f32 %v483, %v483
    %v488 = vrot.slane %v484, 7
    %v489 = vrot.slane %v488, 4
    %v490 = vrot.slane %v485, 7
    %v491 = vrot.slane %v490, 4
    %v494 = vadd.f32 %v398, %v489
    %v495 = vadd.f32 %v399, %v491
    %v498 = vperm.slane %v494, 0
    %v499 = vperm.slane %v494, 4
    %v500 = vperm.slane %v495, 0
    %v501 = vperm.slane %v495, 4
    %vm502 = vcmask 1041409
    %v503 = vsel %vm502, %v500, %v498
    %v504 = vsel %vm502, %v501, %v499
    %vm507 = vcmask 1041408
    %v508 = vsel %vm507, %v503, 0.0
    %v509 = vrot.slane %v508, 4
    %v510 = vadd.f32 %v508, %v509
    %v511 = vrot.slane %v510, 2
    %v512 = vadd.f32 %v510, %v511
    %v513 = vrot.slane %v512, 1
    %v514 = vadd.f32 %v512, %v513
    %v515 = vsel %vm507, %v504, 0.0
    %v516 = vrot.slane %v515, 4
    %v517 = vadd.f32 %v515, %v516
    %v518 = vrot.slane %v517, 2
    %v519 = vadd.f32 %v517, %v518
    %v520 = vrot.slane %v519, 1
    %v521 = vadd.f32 %v519, %v520
    %v524 = vrot.slane %v521, 7
    %vm525 = vcmask 1040384
    %v526 = vsel %vm525, %v514, %v524
    %v528 = vlaneseq
    %vm529 = vcmp.ge.s32.totalorder %v528, 0
    %vm530 = vcmp.lt.s32.totalorder %v528, 256
    %vm531 = vmand %vm529, %vm530
    %532 = vst.msk [vmem:[#allocation9] sm:$0x3] %vm531, %v526
    // Predicated region
    $region38: #{tpu_custom_call.1} parent=1 // pred_check
      _
    $region39: #{tpu_custom_call.1} parent=1 // pred_check_branch
      %534 = sbr.rel (0) target = $region41
    $region40: #{tpu_custom_call.1} parent=1 // pred_region
      %536 = vsyncadd [#allocation4], 0
      %s538 = sshll.u32 [#allocation9], 4
      %s539 = int_to_ptr.vmem [resolvable:$true] %s538
      %s540 = sshll.u32 %s6, 4
      %s541 = int_to_ptr.hbm [resolvable:$true] %s540
      %543 = dma.vmem_to_hbm [thread:$0]  %s539, 32, %s541, [#allocation4]
    $region41: #{tpu_custom_call.1} parent=1 // pred_fallthru
      _
    // Predicated region
    $region42: #{tpu_custom_call.1} parent=1 // pred_check
      _
    $region43: #{tpu_custom_call.1} parent=1 // pred_check_branch
      %545 = sbr.rel (0) target = $region45
    $region44: #{tpu_custom_call.1} parent=1 // pred_region
      %547 = dma.done [#allocation4], 32
    $region45: #{tpu_custom_call.1} parent=1 // pred_fallthru
      _
    %548 = vsyncpa [#allocation3], 1
    %549 = vsyncpa [#allocation8], 1
    %550 = vsyncpa [#allocation4], 1
    %551 = vsyncpa [#allocation5], 1

</llo_original>
